<compile_context>
chip_gen: v6e
topology: v6e:2x2x1
jax: 0.10.0
libtpu: 0.0.40
codegen_flags: <defaults>
</compile_context>

<pallas_src>
import functools

import numpy as np
import jax
import jax.numpy as jnp
from jax.experimental import pallas as pl
from jax.experimental.pallas import tpu as pltpu

LANE = 128       # TPU lane width (last dim)
SUBLANE = 8      # f32 sublane width (second-to-last dim)
PAD_BIAS = -1e30 # padded head columns: exp(pad - rowmax) == 0 exactly


def _round_up(n, m):
    return ((n + m - 1) // m) * m


# ---------------------------------------------------------------------------
# Fused kernel: trunk + all heads + grouped softmax for one batch tile.
# ---------------------------------------------------------------------------
def fused_aux_kernel(x_ref, w1_ref, b1_ref, w2_ref, b2_ref, wh_ref, bh_ref,
                     bd_ref, out_ref):
    # Trunk: relu(x@W1+b1) -> relu(.@W2+b2); activations never leave VMEM/vregs.
    h = jnp.dot(x_ref[...], w1_ref[...], preferred_element_type=jnp.float32)
    h = jnp.maximum(h + b1_ref[...], 0.0)
    h = jnp.dot(h, w2_ref[...], preferred_element_type=jnp.float32)
    h = jnp.maximum(h + b2_ref[...], 0.0)

    # All heads at once (scale already folded into wh/bh): (TB, P) logits.
    z = jnp.dot(h, wh_ref[...], preferred_element_type=jnp.float32) + bh_ref[...]

    # Row-wise max subtraction: a per-row constant is also a per-group constant,
    # so the grouped softmax result is unchanged while staying overflow-safe.
    # Padded columns sit at -1e30 so they never pin the row max.
    z = z - jnp.max(z, axis=-1, keepdims=True)
    e = jnp.exp(z)

    # Broadcast per-group sums back to every column with the precomputed
    # block-diagonal ones matrix (host-built; MXU does the segmented sum).
    s = jnp.dot(e, bd_ref[...], preferred_element_type=jnp.float32)
    s = jnp.maximum(s, 1e-30)            # padded groups sum to 0 -> keep finite

    # EUP approximate reciprocal + one Newton step (rel. err ~1e-7).
    r = pl.reciprocal(s, approx=True)
    r = r * (2.0 - s * r)

    out_ref[...] = (e * r).astype(out_ref.dtype)


# ---------------------------------------------------------------------------
# One-time parameter packing (hoisted out of the forward path).
# ---------------------------------------------------------------------------
def pack_aux_net_params(w1, b1, w2, b2, heads, scale, n_value):
    """Pad trunk to lane-dense shapes, pack all head Linears into one slab.

    * `scale` is folded into the packed head weights/bias -> re-pack if it changes.
    * Each head's column block is padded to a multiple of 128 lanes; padded
      columns get bias -1e30 and a unique group id so they never touch real groups.
    * The block-diagonal group matrix is built here (host) from explicit group ids.
    """
    w1 = jnp.asarray(w1, jnp.float32); b1 = jnp.asarray(b1, jnp.float32)
    w2 = jnp.asarray(w2, jnp.float32); b2 = jnp.asarray(b2, jnp.float32)

    D_in, C = w1.shape
    Dp = _round_up(D_in, LANE)
    Cp = _round_up(C, LANE)

    w1p = jnp.zeros((Dp, Cp), jnp.float32).at[:D_in, :C].set(w1)
    b1p = jnp.zeros((1, Cp), jnp.float32).at[0, :C].set(b1)
    w2p = jnp.zeros((Cp, Cp), jnp.float32).at[:C, :C].set(w2)
    b2p = jnp.zeros((1, Cp), jnp.float32).at[0, :C].set(b2)

    blocks_w, blocks_b, gid_blocks = [], [], []
    head_layout = []           # (column offset, H) per head
    off = 0
    group_base = 0
    for (w, b) in heads:
        w = jnp.asarray(w, jnp.float32); b = jnp.asarray(b, jnp.float32)
        n = int(w.shape[1])                    # H * n_value real columns
        H = n // n_value
        width = _round_up(n, LANE)             # lane-aligned per-head block
        blocks_w.append(jnp.zeros((Cp, width), jnp.float32).at[:C, :n].set(w * scale))
        blocks_b.append(jnp.full((width,), PAD_BIAS, jnp.float32).at[:n].set(b * scale))
        g = np.empty((width,), np.int64)
        g[:n] = group_base + np.arange(n) // n_value          # real softmax groups
        g[n:] = -(off + n + np.arange(width - n) + 1)         # unique ids for padding
        gid_blocks.append(g)
        head_layout.append((off, H))
        group_base += H
        off += width
    P = off

    gid = np.concatenate(gid_blocks)
    block_diag = jnp.asarray((gid[:, None] == gid[None, :]).astype(np.float32))

    return dict(
        w1=w1p, b1=b1p, w2=w2p, b2=b2p,
        wh=jnp.concatenate(blocks_w, axis=1),
        bh=jnp.concatenate(blocks_b).reshape(1, P),
        block_diag=block_diag,
        head_layout=tuple(head_layout),
        n_value=int(n_value), d_in=int(D_in),
        d_pad=int(Dp), c_pad=int(Cp), p_cols=int(P),
    )


# ---------------------------------------------------------------------------
# Forward wrapper: one pallas_call over a (parallel) batch grid, then cheap glue.
# ---------------------------------------------------------------------------
def aux_net_forward(x, packed, *, batch_tile=128):
    B, D_in = x.shape
    assert D_in == packed["d_in"]
    Dp, Cp, P = packed["d_pad"], packed["c_pad"], packed["p_cols"]
    V = packed["n_value"]

    # Batch tile: multiple of 8 sublanes, up to `batch_tile` rows per grid step.
    TB = min(batch_tile, _round_up(B, SUBLANE))
    Bp = _round_up(B, TB)
    x_pad = jnp.pad(x.astype(jnp.float32), ((0, Bp - B), (0, Dp - D_in)))

    flops = 2 * Bp * (Dp * Cp + Cp * Cp + Cp * P + P * P)
    bytes_accessed = 4 * (Bp * Dp + Dp * Cp + Cp * Cp + Cp * P + P * P
                          + 2 * Cp + P + Bp * P)
    cost = pl.CostEstimate(flops=int(flops), transcendentals=int(Bp * P),
                           bytes_accessed=int(bytes_accessed))

    # VMEM footprint (weights + block_diag + 2x double-buffered x/out tiles) is
    # well under 1 MiB here; set vmem_limit_bytes explicitly if C/P ever grow.
    out = pl.pallas_call(
        fused_aux_kernel,
        out_shape=jax.ShapeDtypeStruct((Bp, P), jnp.float32),
        grid=(Bp // TB,),
        in_specs=[
            pl.BlockSpec((TB, Dp), lambda i: (i, 0)),   # x: tiled over batch
            pl.BlockSpec((Dp, Cp), lambda i: (0, 0)),   # w1 (resident)
            pl.BlockSpec((1, Cp), lambda i: (0, 0)),    # b1
            pl.BlockSpec((Cp, Cp), lambda i: (0, 0)),   # w2
            pl.BlockSpec((1, Cp), lambda i: (0, 0)),    # b2
            pl.BlockSpec((Cp, P), lambda i: (0, 0)),    # packed head weights
            pl.BlockSpec((1, P), lambda i: (0, 0)),     # packed head bias
            pl.BlockSpec((P, P), lambda i: (0, 0)),     # block-diag group matrix
        ],
        out_specs=pl.BlockSpec((TB, P), lambda i: (i, 0)),
        compiler_params=pltpu.CompilerParams(
            dimension_semantics=("parallel",)),          # shard batch tiles (v7x 2 TCs)
        cost_estimate=cost,
    )(x_pad, packed["w1"], packed["b1"], packed["w2"], packed["b2"],
      packed["wh"], packed["bh"], packed["block_diag"])

    # Per-head views: slices start on 128-lane boundaries (head blocks padded).
    heads = []
    for (off, H) in packed["head_layout"]:
        heads.append(out[:B, off:off + H * V].reshape(B, H, V))
    return heads


# ---------------------------------------------------------------------------
# Pure-JAX reference (mirrors the PyTorch semantics).
# ---------------------------------------------------------------------------
def aux_net_reference(x, w1, b1, w2, b2, heads, scale, n_value):
    t = jnp.maximum(x @ w1 + b1, 0.0)
    t = jnp.maximum(t @ w2 + b2, 0.0)
    outs = []
    for (w, b) in heads:
        buf = t @ w + b
        buf = buf.reshape(buf.shape[0], -1, n_value)
        outs.append(jax.nn.softmax(buf * scale, axis=2))
    return outs


# ---------------------------------------------------------------------------
# Main
# ---------------------------------------------------------------------------
if __name__ == "__main__":
    batch = 2
    inputs_size = 16
    channels = 32
    hidden_size_list = [8, 12]
    n_value = 4
    scale = 0.5

    key = jax.random.PRNGKey(0)
    keys = jax.random.split(key, 8)

    def init_linear(kw, kb, fan_in, fan_out):
        bound = 1.0 / np.sqrt(fan_in)
        w = jax.random.uniform(kw, (fan_in, fan_out), jnp.float32, -bound, bound)
        b = jax.random.uniform(kb, (fan_out,), jnp.float32, -bound, bound)
        return w, b

    w1, b1v = init_linear(keys[0], keys[1], inputs_size, channels)
    w2, b2v = init_linear(keys[2], keys[3], channels, channels)

    head_params = []
    hk = jax.random.split(keys[4], 2 * len(hidden_size_list))
    for i, h in enumerate(hidden_size_list):
        w, b = init_linear(hk[2 * i], hk[2 * i + 1], channels, h * n_value)
        head_params.append((w, b))

    # One-time packing (outside the inference path); scale folded into weights.
    packed = pack_aux_net_params(w1, b1v, w2, b2v, head_params, scale, n_value)
    packed = {k: (jax.block_until_ready(v) if isinstance(v, jax.Array) else v)
              for k, v in packed.items()}

    # Check the small case (module-consistent shapes) and a larger batch that
    # exercises batch padding + the multi-tile parallel grid.
    for test_batch in (batch, 200):
        x = jax.random.normal(jax.random.fold_in(keys[5], test_batch),
                              (test_batch, inputs_size), dtype=jnp.float32)
        outs = aux_net_forward(x, packed)
        outs = [jax.block_until_ready(o) for o in outs]
        refs = aux_net_reference(x, w1, b1v, w2, b2v, head_params, scale, n_value)
        for o, r, h in zip(outs, refs, hidden_size_list):
            assert o.shape == (test_batch, h, n_value), (o.shape,
                                                         (test_batch, h, n_value))
            err = float(np.max(np.abs(np.asarray(o) - np.asarray(r))))
            assert np.allclose(np.asarray(o), np.asarray(r),
                               atol=1e-5, rtol=1e-5), err

    print("KERNEL_OK")
</pallas_src>

<mosaic_0001>
module attributes {stable_mosaic.version = 11 : i64} {
  func.func @fused_aux_kernel(%arg0: i32, %arg1: memref<8x128xf32, #tpu.memory_space<vmem>>, %arg2: memref<128x128xf32, #tpu.memory_space<vmem>>, %arg3: memref<1x128xf32, #tpu.memory_space<vmem>>, %arg4: memref<128x128xf32, #tpu.memory_space<vmem>>, %arg5: memref<1x128xf32, #tpu.memory_space<vmem>>, %arg6: memref<128x256xf32, #tpu.memory_space<vmem>>, %arg7: memref<1x256xf32, #tpu.memory_space<vmem>>, %arg8: memref<256x256xf32, #tpu.memory_space<vmem>>, %arg9: memref<8x256xf32, #tpu.memory_space<vmem>>) attributes {dimension_semantics = [#tpu.dimension_semantics<parallel>], iteration_bounds = array<i64: 1>, scalar_prefetch = 0 : i64, scratch_operands = 0 : i64, tpu.core_type = #tpu.core_type<tc>, window_params = [{transform_indices = @transform_0, window_bounds = array<i64: 8, 128>}, {pipeline_mode = #tpu.pipeline_mode<synchronous>, transform_indices = @transform_1, window_bounds = array<i64: 128, 128>}, {pipeline_mode = #tpu.pipeline_mode<synchronous>, transform_indices = @transform_2, window_bounds = array<i64: 1, 128>}, {pipeline_mode = #tpu.pipeline_mode<synchronous>, transform_indices = @transform_3, window_bounds = array<i64: 128, 128>}, {pipeline_mode = #tpu.pipeline_mode<synchronous>, transform_indices = @transform_4, window_bounds = array<i64: 1, 128>}, {pipeline_mode = #tpu.pipeline_mode<synchronous>, transform_indices = @transform_5, window_bounds = array<i64: 128, 256>}, {pipeline_mode = #tpu.pipeline_mode<synchronous>, transform_indices = @transform_6, window_bounds = array<i64: 1, 256>}, {pipeline_mode = #tpu.pipeline_mode<synchronous>, transform_indices = @transform_7, window_bounds = array<i64: 256, 256>}, {transform_indices = @transform_8, window_bounds = array<i64: 8, 256>}]} {
    %c0 = arith.constant 0 : index
    %c0_0 = arith.constant 0 : index
    %0 = vector.load %arg1[%c0, %c0_0] : memref<8x128xf32, #tpu.memory_space<vmem>>, vector<8x128xf32>
    %c0_1 = arith.constant 0 : index
    %c0_2 = arith.constant 0 : index
    %1 = vector.load %arg2[%c0_1, %c0_2] : memref<128x128xf32, #tpu.memory_space<vmem>>, vector<128x128xf32>
    %cst = arith.constant dense<0.000000e+00> : vector<8x128xf32>
    %2 = tpu.matmul %0, %1, %cst {dimension_numbers = #tpu.dot_dimension_numbers<[1], [0], [0], [1], [0, 0, 1, 1], [], []>} : vector<8x128xf32>, vector<128x128xf32>, vector<8x128xf32> -> vector<8x128xf32>
    %c0_3 = arith.constant 0 : index
    %c0_4 = arith.constant 0 : index
    %3 = vector.load %arg3[%c0_3, %c0_4] : memref<1x128xf32, #tpu.memory_space<vmem>>, vector<1x128xf32>
    %4 = vector.broadcast %3 : vector<1x128xf32> to vector<8x128xf32>
    %5 = arith.addf %2, %4 : vector<8x128xf32>
    %cst_5 = arith.constant 0.000000e+00 : f32
    %6 = vector.broadcast %cst_5 : f32 to vector<8x128xf32>
    %7 = arith.maximumf %5, %6 : vector<8x128xf32>
    %c0_6 = arith.constant 0 : index
    %c0_7 = arith.constant 0 : index
    %8 = vector.load %arg4[%c0_6, %c0_7] : memref<128x128xf32, #tpu.memory_space<vmem>>, vector<128x128xf32>
    %cst_8 = arith.constant dense<0.000000e+00> : vector<8x128xf32>
    %9 = tpu.matmul %7, %8, %cst_8 {dimension_numbers = #tpu.dot_dimension_numbers<[1], [0], [0], [1], [0, 0, 1, 1], [], []>} : vector<8x128xf32>, vector<128x128xf32>, vector<8x128xf32> -> vector<8x128xf32>
    %c0_9 = arith.constant 0 : index
    %c0_10 = arith.constant 0 : index
    %10 = vector.load %arg5[%c0_9, %c0_10] : memref<1x128xf32, #tpu.memory_space<vmem>>, vector<1x128xf32>
    %11 = vector.broadcast %10 : vector<1x128xf32> to vector<8x128xf32>
    %12 = arith.addf %9, %11 : vector<8x128xf32>
    %cst_11 = arith.constant 0.000000e+00 : f32
    %13 = vector.broadcast %cst_11 : f32 to vector<8x128xf32>
    %14 = arith.maximumf %12, %13 : vector<8x128xf32>
    %c0_12 = arith.constant 0 : index
    %c0_13 = arith.constant 0 : index
    %15 = vector.load %arg6[%c0_12, %c0_13] : memref<128x256xf32, #tpu.memory_space<vmem>>, vector<128x256xf32>
    %cst_14 = arith.constant dense<0.000000e+00> : vector<8x256xf32>
    %16 = tpu.matmul %14, %15, %cst_14 {dimension_numbers = #tpu.dot_dimension_numbers<[1], [0], [0], [1], [0, 0, 1, 1], [], []>} : vector<8x128xf32>, vector<128x256xf32>, vector<8x256xf32> -> vector<8x256xf32>
    %c0_15 = arith.constant 0 : index
    %c0_16 = arith.constant 0 : index
    %17 = vector.load %arg7[%c0_15, %c0_16] : memref<1x256xf32, #tpu.memory_space<vmem>>, vector<1x256xf32>
    %18 = vector.broadcast %17 : vector<1x256xf32> to vector<8x256xf32>
    %19 = arith.addf %16, %18 : vector<8x256xf32>
    %cst_17 = arith.constant dense<0xFF800000> : vector<8xf32>
    %20 = vector.multi_reduction <maximumf>, %19, %cst_17 [1] : vector<8x256xf32> to vector<8xf32>
    %21 = vector.shape_cast %20 : vector<8xf32> to vector<8x1xf32>
    %22 = vector.broadcast %21 : vector<8x1xf32> to vector<8x256xf32>
    %23 = arith.subf %19, %22 : vector<8x256xf32>
    %24 = math.exp %23 : vector<8x256xf32>
    %c0_18 = arith.constant 0 : index
    %c0_19 = arith.constant 0 : index
    %25 = vector.load %arg8[%c0_18, %c0_19] : memref<256x256xf32, #tpu.memory_space<vmem>>, vector<256x256xf32>
    %cst_20 = arith.constant dense<0.000000e+00> : vector<8x256xf32>
    %26 = tpu.matmul %24, %25, %cst_20 {dimension_numbers = #tpu.dot_dimension_numbers<[1], [0], [0], [1], [0, 0, 1, 1], [], []>} : vector<8x256xf32>, vector<256x256xf32>, vector<8x256xf32> -> vector<8x256xf32>
    %cst_21 = arith.constant 1.000000e-30 : f32
    %27 = vector.broadcast %cst_21 : f32 to vector<8x256xf32>
    %28 = arith.maximumf %26, %27 : vector<8x256xf32>
    %29 = tpu.reciprocal %28 {approx = true} : vector<8x256xf32> -> vector<8x256xf32>
    %30 = arith.mulf %28, %29 : vector<8x256xf32>
    %cst_22 = arith.constant 2.000000e+00 : f32
    %31 = vector.broadcast %cst_22 : f32 to vector<8x256xf32>
    %32 = arith.subf %31, %30 : vector<8x256xf32>
    %33 = arith.mulf %29, %32 : vector<8x256xf32>
    %34 = arith.mulf %24, %33 : vector<8x256xf32>
    %c0_23 = arith.constant 0 : index
    %c0_24 = arith.constant 0 : index
    %35 = vector.load %arg9[%c0_23, %c0_24] : memref<8x256xf32, #tpu.memory_space<vmem>>, vector<8x256xf32>
    tpu.vector_store %arg9[%c0_23, %c0_24], %34 {strides = array<i32>} : memref<8x256xf32, #tpu.memory_space<vmem>>, vector<8x256xf32>,
    return
  }
  func.func @transform_0(%arg0: i32) -> (i32, i32) {
    %c0_i32 = arith.constant 0 : i32
    %c0_i32_0 = arith.constant 0 : i32
    return %arg0, %c0_i32 : i32, i32
  }
  func.func @transform_1(%arg0: i32) -> (i32, i32) {
    %c0_i32 = arith.constant 0 : i32
    %c0_i32_0 = arith.constant 0 : i32
    %c0_i32_1 = arith.constant 0 : i32
    return %c0_i32, %c0_i32_0 : i32, i32
  }
  func.func @transform_2(%arg0: i32) -> (i32, i32) {
    %c0_i32 = arith.constant 0 : i32
    %c0_i32_0 = arith.constant 0 : i32
    %c0_i32_1 = arith.constant 0 : i32
    return %c0_i32, %c0_i32_0 : i32, i32
  }
  func.func @transform_3(%arg0: i32) -> (i32, i32) {
    %c0_i32 = arith.constant 0 : i32
    %c0_i32_0 = arith.constant 0 : i32
    %c0_i32_1 = arith.constant 0 : i32
    return %c0_i32, %c0_i32_0 : i32, i32
  }
  func.func @transform_4(%arg0: i32) -> (i32, i32) {
    %c0_i32 = arith.constant 0 : i32
    %c0_i32_0 = arith.constant 0 : i32
    %c0_i32_1 = arith.constant 0 : i32
    return %c0_i32, %c0_i32_0 : i32, i32
  }
  func.func @transform_5(%arg0: i32) -> (i32, i32) {
    %c0_i32 = arith.constant 0 : i32
    %c0_i32_0 = arith.constant 0 : i32
    %c0_i32_1 = arith.constant 0 : i32
    return %c0_i32, %c0_i32_0 : i32, i32
  }
  func.func @transform_6(%arg0: i32) -> (i32, i32) {
    %c0_i32 = arith.constant 0 : i32
    %c0_i32_0 = arith.constant 0 : i32
    %c0_i32_1 = arith.constant 0 : i32
    return %c0_i32, %c0_i32_0 : i32, i32
  }
  func.func @transform_7(%arg0: i32) -> (i32, i32) {
    %c0_i32 = arith.constant 0 : i32
    %c0_i32_0 = arith.constant 0 : i32
    %c0_i32_1 = arith.constant 0 : i32
    return %c0_i32, %c0_i32_0 : i32, i32
  }
  func.func @transform_8(%arg0: i32) -> (i32, i32) {
    %c0_i32 = arith.constant 0 : i32
    %c0_i32_0 = arith.constant 0 : i32
    return %arg0, %c0_i32 : i32, i32
  }
}

</mosaic_0001>

<llo_original>
// kernel: tpu_custom_call.1
$region0: #{tpu_custom_call.1}
  #allocation0 [shape = 'u32[]', space=smem, size = 0x4, offset = 0x4, fixed_abs, tag = 'smem constant byte address 0x4 - core index']
  #allocation1 [shape = 'u32[144,128]{1,0:T(1,128)}', space=vmem, size = 0x12000, scoped, tag = 'internal scratch']
  %s0 = inlined_call_operand.hbm [shape: f32[8,128], index: 0, kind: input, shape index: {}]
  %s1 = inlined_call_operand.hbm [shape: f32[128,128], index: 1, kind: input, shape index: {}]
  %s2 = inlined_call_operand.vmem [shape: f32[1,128], index: 2, kind: input, shape index: {}]
  %s3 = inlined_call_operand.hbm [shape: f32[128,128], index: 3, kind: input, shape index: {}]
  %s4 = inlined_call_operand.vmem [shape: f32[1,128], index: 4, kind: input, shape index: {}]
  %s5 = inlined_call_operand.hbm [shape: f32[128,256], index: 5, kind: input, shape index: {}]
  %s6 = inlined_call_operand.vmem [shape: f32[1,256], index: 6, kind: input, shape index: {}]
  %s7 = inlined_call_operand.hbm [shape: f32[256,256], index: 7, kind: input, shape index: {}]
  %s8 = inlined_call_operand.hbm [shape: f32[8,256], index: 8, kind: output, shape index: {}]
  %s9 = sld [smem:[#allocation0]]
  $region62: #{tpu_custom_call.1} parent=0
    _
  %s11 = ssub.s32 1, %s9
  %s12 = scalar_select 0, %s11, %s9
  $region1: #{tpu_custom_call.1} parent=0
    #allocation2 [shape = 'u8[4096]{0}', space=vmem, size = 0x1000, scoped, tag = 'input window, operand 0, single buffered']
    #allocation3 [shape = 's32[1]{0}', space=sflag, size = 0x4, scoped, tag = 'scoped memory for tpu_custom_call.1']
    #allocation4 [shape = 's32[1]{0}', space=sflag, size = 0x4, scoped, tag = 'scoped memory for tpu_custom_call.1']
    #allocation5 [shape = 'u8[65536]{0}', space=vmem, size = 0x10000, scoped, tag = 'input window, operand 1, single buffered']
    #allocation6 [shape = 's32[1]{0}', space=sflag, size = 0x4, scoped, tag = 'scoped memory for tpu_custom_call.1']
    #allocation7 [shape = 'u8[65536]{0}', space=vmem, size = 0x10000, scoped, tag = 'input window, operand 3, single buffered']
    #allocation8 [shape = 'u8[131072]{0}', space=vmem, size = 0x20000, scoped, tag = 'input window, operand 5, single buffered']
    #allocation9 [shape = 's32[1]{0}', space=sflag, size = 0x4, scoped, tag = 'scoped memory for tpu_custom_call.1']
    #allocation10 [shape = 'u8[262144]{0}', space=vmem, size = 0x40000, scoped, tag = 'input window, operand 7, single buffered']
    #allocation11 [shape = 'u8[8192]{0}', space=vmem, size = 0x2000, scoped, tag = 'output window, operand 0, single buffered']
    %13 = vsyncpa [#allocation3], 0
    %14 = vsyncpa [#allocation6], 0
    %15 = vsyncpa [#allocation9], 0
    %16 = vsyncpa [#allocation4], 0
    // Predicated region
    $region2: #{tpu_custom_call.1} parent=1 // pred_check
      _
    $region3: #{tpu_custom_call.1} parent=1 // pred_check_branch
      %18 = sbr.rel (0) target = $region5
    $region4: #{tpu_custom_call.1} parent=1 // pred_region
      %s20 = ssub.s32 128, 128
      %21 = vsyncadd [#allocation3], %s20
      %s23 = sshll.u32 [#allocation2], 4
      %s24 = int_to_ptr.vmem [resolvable:$true] %s23
      %26 = dma.hbm_to_vmem [thread:$0]  %s0, 128, %s24, [#allocation3]
    $region5: #{tpu_custom_call.1} parent=1 // pred_fallthru
      _
    // Predicated region
    $region6: #{tpu_custom_call.1} parent=1 // pred_check
      _
    $region7: #{tpu_custom_call.1} parent=1 // pred_check_branch
      %28 = sbr.rel (0) target = $region9
    $region8: #{tpu_custom_call.1} parent=1 // pred_region
      %s30 = ssub.s32 2048, 2048
      %31 = vsyncadd [#allocation6], %s30
      %s32 = sshll.u32 [#allocation5], 4
      %s33 = int_to_ptr.vmem [resolvable:$true] %s32
      %38 = dma.hbm_to_vmem [thread:$0]  %s1, 2048, %s33, [#allocation6], 128, 128, 8
    $region9: #{tpu_custom_call.1} parent=1 // pred_fallthru
      _
    // Predicated region
    $region10: #{tpu_custom_call.1} parent=1 // pred_check
      _
    $region11: #{tpu_custom_call.1} parent=1 // pred_check_branch
      %40 = sbr.rel (0) target = $region13
    $region12: #{tpu_custom_call.1} parent=1 // pred_region
      _
    $region13: #{tpu_custom_call.1} parent=1 // pred_fallthru
      _
    // Predicated region
    $region14: #{tpu_custom_call.1} parent=1 // pred_check
      _
    $region15: #{tpu_custom_call.1} parent=1 // pred_check_branch
      %42 = sbr.rel (0) target = $region17
    $region16: #{tpu_custom_call.1} parent=1 // pred_region
      %s44 = ssub.s32 2048, 2048
      %45 = vsyncadd [#allocation6], %s44
      %s46 = sshll.u32 [#allocation7], 4
      %s47 = int_to_ptr.vmem [resolvable:$true] %s46
      %52 = dma.hbm_to_vmem [thread:$0]  %s3, 2048, %s47, [#allocation6], 128, 128, 8
    $region17: #{tpu_custom_call.1} parent=1 // pred_fallthru
      _
    // Predicated region
    $region18: #{tpu_custom_call.1} parent=1 // pred_check
      _
    $region19: #{tpu_custom_call.1} parent=1 // pred_check_branch
      %54 = sbr.rel (0) target = $region21
    $region20: #{tpu_custom_call.1} parent=1 // pred_region
      _
    $region21: #{tpu_custom_call.1} parent=1 // pred_fallthru
      _
    // Predicated region
    $region22: #{tpu_custom_call.1} parent=1 // pred_check
      _
    $region23: #{tpu_custom_call.1} parent=1 // pred_check_branch
      %56 = sbr.rel (0) target = $region25
    $region24: #{tpu_custom_call.1} parent=1 // pred_region
      %s58 = ssub.s32 4096, 4096
      %59 = vsyncadd [#allocation9], %s58
      %s60 = sshll.u32 [#allocation8], 4
      %s61 = int_to_ptr.vmem [resolvable:$true] %s60
      %66 = dma.hbm_to_vmem [thread:$0]  %s5, 4096, %s61, [#allocation9], 256, 256, 16
    $region25: #{tpu_custom_call.1} parent=1 // pred_fallthru
      _
    // Predicated region
    $region26: #{tpu_custom_call.1} parent=1 // pred_check
      _
    $region27: #{tpu_custom_call.1} parent=1 // pred_check_branch
      %68 = sbr.rel (0) target = $region29
    $region28: #{tpu_custom_call.1} parent=1 // pred_region
      _
    $region29: #{tpu_custom_call.1} parent=1 // pred_fallthru
      _
    // Predicated region
    $region30: #{tpu_custom_call.1} parent=1 // pred_check
      _
    $region31: #{tpu_custom_call.1} parent=1 // pred_check_branch
      %70 = sbr.rel (0) target = $region33
    $region32: #{tpu_custom_call.1} parent=1 // pred_region
      %s72 = ssub.s32 8192, 8192
      %73 = vsyncadd [#allocation9], %s72
      %s74 = sshll.u32 [#allocation10], 4
      %s75 = int_to_ptr.vmem [resolvable:$true] %s74
      %80 = dma.hbm_to_vmem [thread:$0]  %s7, 8192, %s75, [#allocation9], 256, 256, 16
    $region33: #{tpu_custom_call.1} parent=1 // pred_fallthru
      _
    // Predicated region
    $region34: #{tpu_custom_call.1} parent=1 // pred_check
      _
    $region35: #{tpu_custom_call.1} parent=1 // pred_check_branch
      %82 = sbr.rel (0) target = $region37
    $region36: #{tpu_custom_call.1} parent=1 // pred_region
      %83 = dma.done [#allocation3], 128
    $region37: #{tpu_custom_call.1} parent=1 // pred_fallthru
      _
    // Predicated region
    $region38: #{tpu_custom_call.1} parent=1 // pred_check
      _
    $region39: #{tpu_custom_call.1} parent=1 // pred_check_branch
      %85 = sbr.rel (0) target = $region41
    $region40: #{tpu_custom_call.1} parent=1 // pred_region
      %86 = dma.done [#allocation6], 2048
    $region41: #{tpu_custom_call.1} parent=1 // pred_fallthru
      _
    // Predicated region
    $region42: #{tpu_custom_call.1} parent=1 // pred_check
      _
    $region43: #{tpu_custom_call.1} parent=1 // pred_check_branch
      %88 = sbr.rel (0) target = $region45
    $region44: #{tpu_custom_call.1} parent=1 // pred_region
      %89 = dma.done [#allocation6], 2048
    $region45: #{tpu_custom_call.1} parent=1 // pred_fallthru
      _
    // Predicated region
    $region46: #{tpu_custom_call.1} parent=1 // pred_check
      _
    $region47: #{tpu_custom_call.1} parent=1 // pred_check_branch
      %91 = sbr.rel (0) target = $region49
    $region48: #{tpu_custom_call.1} parent=1 // pred_region
      %92 = dma.done [#allocation9], 4096
    $region49: #{tpu_custom_call.1} parent=1 // pred_fallthru
      _
    // Predicated region
    $region50: #{tpu_custom_call.1} parent=1 // pred_check
      _
    $region51: #{tpu_custom_call.1} parent=1 // pred_check_branch
      %94 = sbr.rel (0) target = $region53
    $region52: #{tpu_custom_call.1} parent=1 // pred_region
      %95 = dma.done [#allocation9], 8192
    $region53: #{tpu_custom_call.1} parent=1 // pred_fallthru
      _
    %v96 = vld [vmem:[#allocation2] sm:$0xff]
    %v97 = vld [vmem:[#allocation5] sm:$0xff]
    %v98 = vld [vmem:[#allocation5 + $0x8] sm:$0xff]
    %v99 = vld [vmem:[#allocation5 + $0x10] sm:$0xff]
    %v100 = vld [vmem:[#allocation5 + $0x18] sm:$0xff]
    %v101 = vld [vmem:[#allocation5 + $0x20] sm:$0xff]
    %v102 = vld [vmem:[#allocation5 + $0x28] sm:$0xff]
    %v103 = vld [vmem:[#allocation5 + $0x30] sm:$0xff]
    %v104 = vld [vmem:[#allocation5 + $0x38] sm:$0xff]
    %v105 = vld [vmem:[#allocation5 + $0x40] sm:$0xff]
    %v106 = vld [vmem:[#allocation5 + $0x48] sm:$0xff]
    %v107 = vld [vmem:[#allocation5 + $0x50] sm:$0xff]
    %v108 = vld [vmem:[#allocation5 + $0x58] sm:$0xff]
    %v109 = vld [vmem:[#allocation5 + $0x60] sm:$0xff]
    %v110 = vld [vmem:[#allocation5 + $0x68] sm:$0xff]
    %v111 = vld [vmem:[#allocation5 + $0x70] sm:$0xff]
    %v112 = vld [vmem:[#allocation5 + $0x78] sm:$0xff]
    %v113 = vld [vmem:[%s2] sm:$0x1]
    %v115 = vlaneseq
    %v116 = vshrl.u32 %v115, 7
    %v117 = vsub.s32 0, %v116
    %v118 = vrot.slane %v113, %v117
    %120 = vmatprep.subr.mxu0 0.0
    %121 = vmatpush1.msra.mxu0 %v112
    %122 = vmatprep.subr.mxu0 0.0
    %123 = vmatpush1.msra.mxu0 %v111
    %124 = vmatprep.subr.mxu0 0.0
    %125 = vmatpush1.msra.mxu0 %v110
    %126 = vmatprep.subr.mxu0 0.0
    %127 = vmatpush1.msra.mxu0 %v109
    %128 = vmatprep.subr.mxu0 0.0
    %129 = vmatpush1.msra.mxu0 %v108
    %130 = vmatprep.subr.mxu0 0.0
    %131 = vmatpush1.msra.mxu0 %v107
    %132 = vmatprep.subr.mxu0 0.0
    %133 = vmatpush1.msra.mxu0 %v106
    %134 = vmatprep.subr.mxu0 0.0
    %135 = vmatpush1.msra.mxu0 %v105
    %136 = vmatprep.subr.mxu0 0.0
    %137 = vmatpush1.msra.mxu0 %v104
    %138 = vmatprep.subr.mxu0 0.0
    %139 = vmatpush1.msra.mxu0 %v103
    %140 = vmatprep.subr.mxu0 0.0
    %141 = vmatpush1.msra.mxu0 %v102
    %142 = vmatprep.subr.mxu0 0.0
    %143 = vmatpush1.msra.mxu0 %v101
    %144 = vmatprep.subr.mxu0 0.0
    %145 = vmatpush1.msra.mxu0 %v100
    %146 = vmatprep.subr.mxu0 0.0
    %147 = vmatpush1.msra.mxu0 %v99
    %148 = vmatprep.subr.mxu0 0.0
    %149 = vmatpush1.msra.mxu0 %v98
    %150 = vmatprep.subr.mxu0 0.0
    %151 = vmatpush1.msra.mxu0 %v97
    %152 = vmatprep.subr.mxu0 0.0
    %153 = vmatpush2.msra.mxu0 0.0
    %154 = vmatprep.subr.mxu0 0.0
    %155 = vmatpush2.msra.mxu0 0.0
    %156 = vmatprep.subr.mxu0 0.0
    %157 = vmatpush2.msra.mxu0 0.0
    %158 = vmatprep.subr.mxu0 0.0
    %159 = vmatpush2.msra.mxu0 0.0
    %160 = vmatprep.subr.mxu0 0.0
    %161 = vmatpush2.msra.mxu0 0.0
    %162 = vmatprep.subr.mxu0 0.0
    %163 = vmatpush2.msra.mxu0 0.0
    %164 = vmatprep.subr.mxu0 0.0
    %165 = vmatpush2.msra.mxu0 0.0
    %166 = vmatprep.subr.mxu0 0.0
    %167 = vmatpush2.msra.mxu0 0.0
    %168 = vmatprep.subr.mxu0 0.0
    %169 = vmatpush2.msra.mxu0 0.0
    %170 = vmatprep.subr.mxu0 0.0
    %171 = vmatpush2.msra.mxu0 0.0
    %172 = vmatprep.subr.mxu0 0.0
    %173 = vmatpush2.msra.mxu0 0.0
    %174 = vmatprep.subr.mxu0 0.0
    %175 = vmatpush2.msra.mxu0 0.0
    %176 = vmatprep.subr.mxu0 0.0
    %177 = vmatpush2.msra.mxu0 0.0
    %178 = vmatprep.subr.mxu0 0.0
    %179 = vmatpush2.msra.mxu0 0.0
    %180 = vmatprep.subr.mxu0 0.0
    %181 = vmatpush2.msra.mxu0 0.0
    %182 = vmatprep.subr.mxu0 0.0
    %183 = vmatpush2.msra.mxu0 0.0
    %184 = vmatprep.mubr.f32.mxu0 0.0
    %185 = vmatmul.mubr.f32.gmra.mxu0 %v96
    %v186 = vpop.f32.mrf.mxu0
    %v187 = vadd.f32 %v118, %v186
    %v188 = vpop.f32.mrf.mxu0
    %189 = vdwg.mxu0
    %v190 = vmax.f32 %v187, 0.0
    %v191 = vld [vmem:[#allocation7] sm:$0xff]
    %v192 = vld [vmem:[#allocation7 + $0x8] sm:$0xff]
    %v193 = vld [vmem:[#allocation7 + $0x10] sm:$0xff]
    %v194 = vld [vmem:[#allocation7 + $0x18] sm:$0xff]
    %v195 = vld [vmem:[#allocation7 + $0x20] sm:$0xff]
    %v196 = vld [vmem:[#allocation7 + $0x28] sm:$0xff]
    %v197 = vld [vmem:[#allocation7 + $0x30] sm:$0xff]
    %v198 = vld [vmem:[#allocation7 + $0x38] sm:$0xff]
    %v199 = vld [vmem:[#allocation7 + $0x40] sm:$0xff]
    %v200 = vld [vmem:[#allocation7 + $0x48] sm:$0xff]
    %v201 = vld [vmem:[#allocation7 + $0x50] sm:$0xff]
    %v202 = vld [vmem:[#allocation7 + $0x58] sm:$0xff]
    %v203 = vld [vmem:[#allocation7 + $0x60] sm:$0xff]
    %v204 = vld [vmem:[#allocation7 + $0x68] sm:$0xff]
    %v205 = vld [vmem:[#allocation7 + $0x70] sm:$0xff]
    %v206 = vld [vmem:[#allocation7 + $0x78] sm:$0xff]
    %v207 = vld [vmem:[%s4] sm:$0x1]
    %v209 = vlaneseq
    %v210 = vshrl.u32 %v209, 7
    %v211 = vsub.s32 0, %v210
    %v212 = vrot.slane %v207, %v211
    %214 = vmatprep.subr.mxu0 0.0
    %215 = vmatpush1.msra.mxu0 %v206
    %216 = vmatprep.subr.mxu0 0.0
    %217 = vmatpush1.msra.mxu0 %v205
    %218 = vmatprep.subr.mxu0 0.0
    %219 = vmatpush1.msra.mxu0 %v204
    %220 = vmatprep.subr.mxu0 0.0
    %221 = vmatpush1.msra.mxu0 %v203
    %222 = vmatprep.subr.mxu0 0.0
    %223 = vmatpush1.msra.mxu0 %v202
    %224 = vmatprep.subr.mxu0 0.0
    %225 = vmatpush1.msra.mxu0 %v201
    %226 = vmatprep.subr.mxu0 0.0
    %227 = vmatpush1.msra.mxu0 %v200
    %228 = vmatprep.subr.mxu0 0.0
    %229 = vmatpush1.msra.mxu0 %v199
    %230 = vmatprep.subr.mxu0 0.0
    %231 = vmatpush1.msra.mxu0 %v198
    %232 = vmatprep.subr.mxu0 0.0
    %233 = vmatpush1.msra.mxu0 %v197
    %234 = vmatprep.subr.mxu0 0.0
    %235 = vmatpush1.msra.mxu0 %v196
    %236 = vmatprep.subr.mxu0 0.0
    %237 = vmatpush1.msra.mxu0 %v195
    %238 = vmatprep.subr.mxu0 0.0
    %239 = vmatpush1.msra.mxu0 %v194
    %240 = vmatprep.subr.mxu0 0.0
    %241 = vmatpush1.msra.mxu0 %v193
    %242 = vmatprep.subr.mxu0 0.0
    %243 = vmatpush1.msra.mxu0 %v192
    %244 = vmatprep.subr.mxu0 0.0
    %245 = vmatpush1.msra.mxu0 %v191
    %246 = vmatprep.subr.mxu0 0.0
    %247 = vmatpush2.msra.mxu0 0.0
    %248 = vmatprep.subr.mxu0 0.0
    %249 = vmatpush2.msra.mxu0 0.0
    %250 = vmatprep.subr.mxu0 0.0
    %251 = vmatpush2.msra.mxu0 0.0
    %252 = vmatprep.subr.mxu0 0.0
    %253 = vmatpush2.msra.mxu0 0.0
    %254 = vmatprep.subr.mxu0 0.0
    %255 = vmatpush2.msra.mxu0 0.0
    %256 = vmatprep.subr.mxu0 0.0
    %257 = vmatpush2.msra.mxu0 0.0
    %258 = vmatprep.subr.mxu0 0.0
    %259 = vmatpush2.msra.mxu0 0.0
    %260 = vmatprep.subr.mxu0 0.0
    %261 = vmatpush2.msra.mxu0 0.0
    %262 = vmatprep.subr.mxu0 0.0
    %263 = vmatpush2.msra.mxu0 0.0
    %264 = vmatprep.subr.mxu0 0.0
    %265 = vmatpush2.msra.mxu0 0.0
    %266 = vmatprep.subr.mxu0 0.0
    %267 = vmatpush2.msra.mxu0 0.0
    %268 = vmatprep.subr.mxu0 0.0
    %269 = vmatpush2.msra.mxu0 0.0
    %270 = vmatprep.subr.mxu0 0.0
    %271 = vmatpush2.msra.mxu0 0.0
    %272 = vmatprep.subr.mxu0 0.0
    %273 = vmatpush2.msra.mxu0 0.0
    %274 = vmatprep.subr.mxu0 0.0
    %275 = vmatpush2.msra.mxu0 0.0
    %276 = vmatprep.subr.mxu0 0.0
    %277 = vmatpush2.msra.mxu0 0.0
    %278 = vmatprep.mubr.f32.mxu0 0.0
    %279 = vmatmul.mubr.f32.gmra.mxu0 %v190
    %v280 = vpop.f32.mrf.mxu0
    %v281 = vadd.f32 %v212, %v280
    %v282 = vpop.f32.mrf.mxu0
    %283 = vdwg.mxu0
    %v284 = vmax.f32 %v281, 0.0
    %v285 = vld [vmem:[#allocation8] sm:$0xff]
    %v286 = vld [vmem:[#allocation8 + $0x8] sm:$0xff]
    %v287 = vld [vmem:[#allocation8 + $0x10] sm:$0xff]
    %v288 = vld [vmem:[#allocation8 + $0x18] sm:$0xff]
    %v289 = vld [vmem:[#allocation8 + $0x20] sm:$0xff]
    %v290 = vld [vmem:[#allocation8 + $0x28] sm:$0xff]
    %v291 = vld [vmem:[#allocation8 + $0x30] sm:$0xff]
    %v292 = vld [vmem:[#allocation8 + $0x38] sm:$0xff]
    %v293 = vld [vmem:[#allocation8 + $0x40] sm:$0xff]
    %v294 = vld [vmem:[#allocation8 + $0x48] sm:$0xff]
    %v295 = vld [vmem:[#allocation8 + $0x50] sm:$0xff]
    %v296 = vld [vmem:[#allocation8 + $0x58] sm:$0xff]
    %v297 = vld [vmem:[#allocation8 + $0x60] sm:$0xff]
    %v298 = vld [vmem:[#allocation8 + $0x68] sm:$0xff]
    %v299 = vld [vmem:[#allocation8 + $0x70] sm:$0xff]
    %v300 = vld [vmem:[#allocation8 + $0x78] sm:$0xff]
    %v301 = vld [vmem:[#allocation8 + $0x80] sm:$0xff]
    %v302 = vld [vmem:[#allocation8 + $0x88] sm:$0xff]
    %v303 = vld [vmem:[#allocation8 + $0x90] sm:$0xff]
    %v304 = vld [vmem:[#allocation8 + $0x98] sm:$0xff]
    %v305 = vld [vmem:[#allocation8 + $0xa0] sm:$0xff]
    %v306 = vld [vmem:[#allocation8 + $0xa8] sm:$0xff]
    %v307 = vld [vmem:[#allocation8 + $0xb0] sm:$0xff]
    %v308 = vld [vmem:[#allocation8 + $0xb8] sm:$0xff]
    %v309 = vld [vmem:[#allocation8 + $0xc0] sm:$0xff]
    %v310 = vld [vmem:[#allocation8 + $0xc8] sm:$0xff]
    %v311 = vld [vmem:[#allocation8 + $0xd0] sm:$0xff]
    %v312 = vld [vmem:[#allocation8 + $0xd8] sm:$0xff]
    %v313 = vld [vmem:[#allocation8 + $0xe0] sm:$0xff]
    %v314 = vld [vmem:[#allocation8 + $0xe8] sm:$0xff]
    %v315 = vld [vmem:[#allocation8 + $0xf0] sm:$0xff]
    %v316 = vld [vmem:[#allocation8 + $0xf8] sm:$0xff]
    %v317 = vld [vmem:[%s6] sm:$0x3]
    %v319 = vlaneseq
    %v320 = vshrl.u32 %v319, 7
    %v321 = vsub.s32 0, %v320
    %v322 = vrot.slane %v317, %v321
    %v323 = vlaneseq
    %v324 = vshrl.u32 %v323, 7
    %v325 = vsub.s32 1, %v324
    %v326 = vrot.slane %v317, %v325
    %329 = vmatprep.subr.mxu0 %v316
    %330 = vmatpush1.msra.mxu0 %v315
    %331 = vmatprep.subr.mxu0 %v314
    %332 = vmatpush1.msra.mxu0 %v313
    %333 = vmatprep.subr.mxu0 %v312
    %334 = vmatpush1.msra.mxu0 %v311
    %335 = vmatprep.subr.mxu0 %v310
    %336 = vmatpush1.msra.mxu0 %v309
    %337 = vmatprep.subr.mxu0 %v308
    %338 = vmatpush1.msra.mxu0 %v307
    %339 = vmatprep.subr.mxu0 %v306
    %340 = vmatpush1.msra.mxu0 %v305
    %341 = vmatprep.subr.mxu0 %v304
    %342 = vmatpush1.msra.mxu0 %v303
    %343 = vmatprep.subr.mxu0 %v302
    %344 = vmatpush1.msra.mxu0 %v301
    %345 = vmatprep.subr.mxu0 %v300
    %346 = vmatpush1.msra.mxu0 %v299
    %347 = vmatprep.subr.mxu0 %v298
    %348 = vmatpush1.msra.mxu0 %v297
    %349 = vmatprep.subr.mxu0 %v296
    %350 = vmatpush1.msra.mxu0 %v295
    %351 = vmatprep.subr.mxu0 %v294
    %352 = vmatpush1.msra.mxu0 %v293
    %353 = vmatprep.subr.mxu0 %v292
    %354 = vmatpush1.msra.mxu0 %v291
    %355 = vmatprep.subr.mxu0 %v290
    %356 = vmatpush1.msra.mxu0 %v289
    %357 = vmatprep.subr.mxu0 %v288
    %358 = vmatpush1.msra.mxu0 %v287
    %359 = vmatprep.subr.mxu0 %v286
    %360 = vmatpush1.msra.mxu0 %v285
    %361 = vmatprep.subr.mxu0 0.0
    %362 = vmatpush2.msra.mxu0 0.0
    %363 = vmatprep.subr.mxu0 0.0
    %364 = vmatpush2.msra.mxu0 0.0
    %365 = vmatprep.subr.mxu0 0.0
    %366 = vmatpush2.msra.mxu0 0.0
    %367 = vmatprep.subr.mxu0 0.0
    %368 = vmatpush2.msra.mxu0 0.0
    %369 = vmatprep.subr.mxu0 0.0
    %370 = vmatpush2.msra.mxu0 0.0
    %371 = vmatprep.subr.mxu0 0.0
    %372 = vmatpush2.msra.mxu0 0.0
    %373 = vmatprep.subr.mxu0 0.0
    %374 = vmatpush2.msra.mxu0 0.0
    %375 = vmatprep.subr.mxu0 0.0
    %376 = vmatpush2.msra.mxu0 0.0
    %377 = vmatprep.subr.mxu0 0.0
    %378 = vmatpush2.msra.mxu0 0.0
    %379 = vmatprep.subr.mxu0 0.0
    %380 = vmatpush2.msra.mxu0 0.0
    %381 = vmatprep.subr.mxu0 0.0
    %382 = vmatpush2.msra.mxu0 0.0
    %383 = vmatprep.subr.mxu0 0.0
    %384 = vmatpush2.msra.mxu0 0.0
    %385 = vmatprep.subr.mxu0 0.0
    %386 = vmatpush2.msra.mxu0 0.0
    %387 = vmatprep.subr.mxu0 0.0
    %388 = vmatpush2.msra.mxu0 0.0
    %389 = vmatprep.subr.mxu0 0.0
    %390 = vmatpush2.msra.mxu0 0.0
    %391 = vmatprep.subr.mxu0 0.0
    %392 = vmatpush2.msra.mxu0 0.0
    %393 = vmatprep.mubr.f32.mxu0 0.0
    %394 = vmatmul.mubr.f32.gmra.mxu0 %v284
    %v395 = vpop.f32.mrf.mxu0
    %v396 = vadd.f32 %v322, %v395
    %v397 = vpop.f32.mrf.mxu0
    %v398 = vadd.f32 %v326, %v397
    %399 = vdwg.mxu0
    %v400 = vmax.f32 %v396, %v398
    %401 = vmax.xlane.f32.xlu0 %v400
    %v402 = vpop.xlane.xlu0 %401
    %v403 = vsub.f32 %v396, %v402
    %v404 = vsub.f32 %v398, %v402
    %v405 = vmul.f32 %v403, 1.442695
    %v406 = vpow.pop %v405
    %v407 = vmul.f32 %v404, 1.442695
    %v408 = vpow.pop %v407
    %v409 = vld [vmem:[#allocation10] sm:$0xff]
    %v410 = vld [vmem:[#allocation10 + $0x8] sm:$0xff]
    %v411 = vld [vmem:[#allocation10 + $0x10] sm:$0xff]
    %v412 = vld [vmem:[#allocation10 + $0x18] sm:$0xff]
    %v413 = vld [vmem:[#allocation10 + $0x20] sm:$0xff]
    %v414 = vld [vmem:[#allocation10 + $0x28] sm:$0xff]
    %v415 = vld [vmem:[#allocation10 + $0x30] sm:$0xff]
    %v416 = vld [vmem:[#allocation10 + $0x38] sm:$0xff]
    %v417 = vld [vmem:[#allocation10 + $0x40] sm:$0xff]
    %v418 = vld [vmem:[#allocation10 + $0x48] sm:$0xff]
    %v419 = vld [vmem:[#allocation10 + $0x50] sm:$0xff]
    %v420 = vld [vmem:[#allocation10 + $0x58] sm:$0xff]
    %v421 = vld [vmem:[#allocation10 + $0x60] sm:$0xff]
    %v422 = vld [vmem:[#allocation10 + $0x68] sm:$0xff]
    %v423 = vld [vmem:[#allocation10 + $0x70] sm:$0xff]
    %v424 = vld [vmem:[#allocation10 + $0x78] sm:$0xff]
    %v425 = vld [vmem:[#allocation10 + $0x80] sm:$0xff]
    %v426 = vld [vmem:[#allocation10 + $0x88] sm:$0xff]
    %v427 = vld [vmem:[#allocation10 + $0x90] sm:$0xff]
    %v428 = vld [vmem:[#allocation10 + $0x98] sm:$0xff]
    %v429 = vld [vmem:[#allocation10 + $0xa0] sm:$0xff]
    %v430 = vld [vmem:[#allocation10 + $0xa8] sm:$0xff]
    %v431 = vld [vmem:[#allocation10 + $0xb0] sm:$0xff]
    %v432 = vld [vmem:[#allocation10 + $0xb8] sm:$0xff]
    %v433 = vld [vmem:[#allocation10 + $0xc0] sm:$0xff]
    %v434 = vld [vmem:[#allocation10 + $0xc8] sm:$0xff]
    %v435 = vld [vmem:[#allocation10 + $0xd0] sm:$0xff]
    %v436 = vld [vmem:[#allocation10 + $0xd8] sm:$0xff]
    %v437 = vld [vmem:[#allocation10 + $0xe0] sm:$0xff]
    %v438 = vld [vmem:[#allocation10 + $0xe8] sm:$0xff]
    %v439 = vld [vmem:[#allocation10 + $0xf0] sm:$0xff]
    %v440 = vld [vmem:[#allocation10 + $0xf8] sm:$0xff]
    %v441 = vld [vmem:[#allocation10 + $0x100] sm:$0xff]
    %v442 = vld [vmem:[#allocation10 + $0x108] sm:$0xff]
    %v443 = vld [vmem:[#allocation10 + $0x110] sm:$0xff]
    %v444 = vld [vmem:[#allocation10 + $0x118] sm:$0xff]
    %v445 = vld [vmem:[#allocation10 + $0x120] sm:$0xff]
    %v446 = vld [vmem:[#allocation10 + $0x128] sm:$0xff]
    %v447 = vld [vmem:[#allocation10 + $0x130] sm:$0xff]
    %v448 = vld [vmem:[#allocation10 + $0x138] sm:$0xff]
    %v449 = vld [vmem:[#allocation10 + $0x140] sm:$0xff]
    %v450 = vld [vmem:[#allocation10 + $0x148] sm:$0xff]
    %v451 = vld [vmem:[#allocation10 + $0x150] sm:$0xff]
    %v452 = vld [vmem:[#allocation10 + $0x158] sm:$0xff]
    %v453 = vld [vmem:[#allocation10 + $0x160] sm:$0xff]
    %v454 = vld [vmem:[#allocation10 + $0x168] sm:$0xff]
    %v455 = vld [vmem:[#allocation10 + $0x170] sm:$0xff]
    %v456 = vld [vmem:[#allocation10 + $0x178] sm:$0xff]
    %v457 = vld [vmem:[#allocation10 + $0x180] sm:$0xff]
    %v458 = vld [vmem:[#allocation10 + $0x188] sm:$0xff]
    %v459 = vld [vmem:[#allocation10 + $0x190] sm:$0xff]
    %v460 = vld [vmem:[#allocation10 + $0x198] sm:$0xff]
    %v461 = vld [vmem:[#allocation10 + $0x1a0] sm:$0xff]
    %v462 = vld [vmem:[#allocation10 + $0x1a8] sm:$0xff]
    %v463 = vld [vmem:[#allocation10 + $0x1b0] sm:$0xff]
    %v464 = vld [vmem:[#allocation10 + $0x1b8] sm:$0xff]
    %v465 = vld [vmem:[#allocation10 + $0x1c0] sm:$0xff]
    %v466 = vld [vmem:[#allocation10 + $0x1c8] sm:$0xff]
    %v467 = vld [vmem:[#allocation10 + $0x1d0] sm:$0xff]
    %v468 = vld [vmem:[#allocation10 + $0x1d8] sm:$0xff]
    %v469 = vld [vmem:[#allocation10 + $0x1e0] sm:$0xff]
    %v470 = vld [vmem:[#allocation10 + $0x1e8] sm:$0xff]
    %v471 = vld [vmem:[#allocation10 + $0x1f0] sm:$0xff]
    %v472 = vld [vmem:[#allocation10 + $0x1f8] sm:$0xff]
    %473 = vmatprep.subr.mxu0 %v440
    %474 = vmatpush1.msra.mxu0 %v439
    %475 = vmatprep.subr.mxu0 %v438
    %476 = vmatpush1.msra.mxu0 %v437
    %477 = vmatprep.subr.mxu0 %v436
    %478 = vmatpush1.msra.mxu0 %v435
    %479 = vmatprep.subr.mxu0 %v434
    %480 = vmatpush1.msra.mxu0 %v433
    %481 = vmatprep.subr.mxu0 %v432
    %482 = vmatpush1.msra.mxu0 %v431
    %483 = vmatprep.subr.mxu0 %v430
    %484 = vmatpush1.msra.mxu0 %v429
    %485 = vmatprep.subr.mxu0 %v428
    %486 = vmatpush1.msra.mxu0 %v427
    %487 = vmatprep.subr.mxu0 %v426
    %488 = vmatpush1.msra.mxu0 %v425
    %489 = vmatprep.subr.mxu0 %v424
    %490 = vmatpush1.msra.mxu0 %v423
    %491 = vmatprep.subr.mxu0 %v422
    %492 = vmatpush1.msra.mxu0 %v421
    %493 = vmatprep.subr.mxu0 %v420
    %494 = vmatpush1.msra.mxu0 %v419
    %495 = vmatprep.subr.mxu0 %v418
    %496 = vmatpush1.msra.mxu0 %v417
    %497 = vmatprep.subr.mxu0 %v416
    %498 = vmatpush1.msra.mxu0 %v415
    %499 = vmatprep.subr.mxu0 %v414
    %500 = vmatpush1.msra.mxu0 %v413
    %501 = vmatprep.subr.mxu0 %v412
    %502 = vmatpush1.msra.mxu0 %v411
    %503 = vmatprep.subr.mxu0 %v410
    %504 = vmatpush1.msra.mxu0 %v409
    %505 = vmatprep.subr.mxu0 %v472
    %506 = vmatpush2.msra.mxu0 %v471
    %507 = vmatprep.subr.mxu0 %v470
    %508 = vmatpush2.msra.mxu0 %v469
    %509 = vmatprep.subr.mxu0 %v468
    %510 = vmatpush2.msra.mxu0 %v467
    %511 = vmatprep.subr.mxu0 %v466
    %512 = vmatpush2.msra.mxu0 %v465
    %513 = vmatprep.subr.mxu0 %v464
    %514 = vmatpush2.msra.mxu0 %v463
    %515 = vmatprep.subr.mxu0 %v462
    %516 = vmatpush2.msra.mxu0 %v461
    %517 = vmatprep.subr.mxu0 %v460
    %518 = vmatpush2.msra.mxu0 %v459
    %519 = vmatprep.subr.mxu0 %v458
    %520 = vmatpush2.msra.mxu0 %v457
    %521 = vmatprep.subr.mxu0 %v456
    %522 = vmatpush2.msra.mxu0 %v455
    %523 = vmatprep.subr.mxu0 %v454
    %524 = vmatpush2.msra.mxu0 %v453
    %525 = vmatprep.subr.mxu0 %v452
    %526 = vmatpush2.msra.mxu0 %v451
    %527 = vmatprep.subr.mxu0 %v450
    %528 = vmatpush2.msra.mxu0 %v449
    %529 = vmatprep.subr.mxu0 %v448
    %530 = vmatpush2.msra.mxu0 %v447
    %531 = vmatprep.subr.mxu0 %v446
    %532 = vmatpush2.msra.mxu0 %v445
    %533 = vmatprep.subr.mxu0 %v444
    %534 = vmatpush2.msra.mxu0 %v443
    %535 = vmatprep.subr.mxu0 %v442
    %536 = vmatpush2.msra.mxu0 %v441
    %537 = vmatprep.mubr.f32.mxu0 %v408
    %538 = vmatmul.mubr.f32.gmra.mxu0 %v406
    %v539 = vpop.f32.mrf.mxu0
    %v540 = vadd.f32 0.0, %v539
    %v541 = vpop.f32.mrf.mxu0
    %v542 = vadd.f32 0.0, %v541
    %543 = vdwg.mxu0
    %v544 = vmax.f32 %v540, 1e-30
    %v545 = vmax.f32 %v542, 1e-30
    %v546 = vrcp.pop %v544
    %v547 = vrcp.pop %v545
    %v548 = vmul.f32 %v544, %v546
    %v549 = vmul.f32 %v545, %v547
    %v550 = vsub.f32 2.0, %v548
    %v551 = vsub.f32 2.0, %v549
    %v552 = vmul.f32 %v546, %v550
    %v553 = vmul.f32 %v547, %v551
    %v554 = vmul.f32 %v406, %v552
    %v555 = vmul.f32 %v408, %v553
    %556 = vst [vmem:[#allocation11] sm:$0xff] %v554
    %557 = vst [vmem:[#allocation11 + $0x8] sm:$0xff] %v555
    // Predicated region
    $region54: #{tpu_custom_call.1} parent=1 // pred_check
      _
    $region55: #{tpu_custom_call.1} parent=1 // pred_check_branch
      %559 = sbr.rel (0) target = $region57
    $region56: #{tpu_custom_call.1} parent=1 // pred_region
      %s561 = ssub.s32 256, 256
      %562 = vsyncadd [#allocation4], %s561
      %s564 = sshll.u32 [#allocation11], 4
      %s565 = int_to_ptr.vmem [resolvable:$true] %s564
      %567 = dma.vmem_to_hbm [thread:$0]  %s565, 256, %s8, [#allocation4]
    $region57: #{tpu_custom_call.1} parent=1 // pred_fallthru
      _
    // Predicated region
    $region58: #{tpu_custom_call.1} parent=1 // pred_check
      _
    $region59: #{tpu_custom_call.1} parent=1 // pred_check_branch
      %569 = sbr.rel (0) target = $region61
    $region60: #{tpu_custom_call.1} parent=1 // pred_region
      %570 = dma.done [#allocation4], 256
    $region61: #{tpu_custom_call.1} parent=1 // pred_fallthru
      _
    %571 = vsyncpa [#allocation3], 1
    %572 = vsyncpa [#allocation6], 1
    %573 = vsyncpa [#allocation9], 1
    %574 = vsyncpa [#allocation4], 1

</llo_original>
